<compile_context>
chip_gen: v6e
topology: v6e:2x2x1
jax: 0.10.0
libtpu: 0.0.40
codegen_flags: <defaults>
</compile_context>

<pallas_src>
import jax
import jax.numpy as jnp
from jax.experimental import pallas as pl
from jax.experimental.pallas import tpu as pltpu


def bahdanau_kernel(h_ref, enc_ref, wht_ref, wet_ref, bias_ref, wo_ref, bo_ref,
                    out_ref):
    # h_ref   : (B, H)    mean-over-decoder-layers hidden state, H lane-dense
    # enc_ref : (B*S, H)  encoder features, one row per (batch, position)
    # bias_ref: (1, H)    bh + be (fused)
    # out_ref : (B, S)    softmax attention weights
    B, S = out_ref.shape
    H = h_ref.shape[1]

    # hidden projection: ONE (B,H)@(H,H) MXU call for all batches
    h_attn = jnp.dot(h_ref[...], wht_ref[...],
                     preferred_element_type=jnp.float32)                    # (B, H)

    # encoder projection: ONE (B*S,H)@(H,H) MXU call for all (batch, pos) rows
    e_attn = jnp.dot(enc_ref[...], wet_ref[...],
                     preferred_element_type=jnp.float32)                    # (B*S, H)

    # broadcast-add the hidden term over the seq axis (sublane split keeps the
    # lane (H) dim intact), fused bias, tanh on the EUP
    res = jnp.tanh(e_attn.reshape(B, S, H)
                   + h_attn[:, None, :]
                   + bias_ref[...])                                         # (B, S, H)

    # out projection (H -> 1) as a VPU multiply + lane reduction (no N=1 MXU
    # push); bo is softmax-shift-invariant but kept for fidelity.
    scores = jnp.sum(res * wo_ref[...], axis=-1) + bo_ref[...]              # (B, S)

    # numerically-stable softmax over S (lane axis); one lane-dense store
    m = jnp.max(scores, axis=-1, keepdims=True)
    e = jnp.exp(scores - m)
    out_ref[...] = e / jnp.sum(e, axis=-1, keepdims=True)


@jax.jit
def bahdanau_attention(hidden, encoder_output, params):
    """hidden: (L, B, H), encoder_output: (B, H, S) -> (B, 1, S)"""
    L, B, H = hidden.shape
    _, _, S = encoder_output.shape
    wh, bh, we, be, wo, bo = params

    # ---- wrapper-side layout plumbing only (fused under jit, no heavy compute) ----
    # torch.bmm(hidden.permute(1,2,0), 1/L addMask) == mean over decoder layers
    h_mean = jnp.mean(hidden, axis=0)                                   # (B, H)
    # (B, H, S) -> rows of (batch, position) with H lane-dense
    enc_rows = jnp.transpose(encoder_output, (0, 2, 1)).reshape(B * S, H)
    # nn.Linear: y = x @ W^T + b  -> pre-transpose weights once
    wh_t = wh.T                                                         # (H, H)
    we_t = we.T                                                         # (H, H)
    bias_row = (bh + be).reshape(1, H)      # both biases are summed before tanh
    wo_row = wo.reshape(1, H)
    bo_sc = bo.reshape(1, 1)

    grid_spec = pltpu.PrefetchScalarGridSpec(
        num_scalar_prefetch=0,
        grid=(1,),                                  # single fused step: all batches
        in_specs=[
            pl.BlockSpec((B, H), lambda i: (0, 0)),       # h_mean
            pl.BlockSpec((B * S, H), lambda i: (0, 0)),   # encoder rows
            pl.BlockSpec((H, H), lambda i: (0, 0)),       # W_hidden_proj^T
            pl.BlockSpec((H, H), lambda i: (0, 0)),       # W_encoder_output_proj^T
            pl.BlockSpec((1, H), lambda i: (0, 0)),       # bh + be
            pl.BlockSpec((1, H), lambda i: (0, 0)),       # W_out (as a row)
            pl.BlockSpec((1, 1), lambda i: (0, 0)),       # b_out
        ],
        out_specs=pl.BlockSpec((B, S), lambda i: (0, 0)),
    )
    out2d = pl.pallas_call(
        bahdanau_kernel,
        out_shape=jax.ShapeDtypeStruct((B, S), jnp.float32),
        grid_spec=grid_spec,
        compiler_params=pltpu.CompilerParams(dimension_semantics=("arbitrary",)),
    )(h_mean, enc_rows, wh_t, we_t, bias_row, wo_row, bo_sc)

    return out2d[:, None, :]                                            # (B, 1, S)


def reference(hidden, encoder_output, params):
    """Pure-JAX transcription of the PyTorch forward (for validation)."""
    wh, bh, we, be, wo, bo = params
    h = jnp.transpose(hidden, (1, 2, 0))                     # (B, H, L)
    h = jnp.mean(h, axis=2)                                  # bmm with 1/L addMask
    h_attn = h @ wh.T + bh                                   # (B, H)
    enc = jnp.transpose(encoder_output, (0, 2, 1))           # (B, S, H)
    e_attn = enc @ we.T + be                                 # (B, S, H)
    res = jnp.tanh(e_attn + h_attn[:, None, :])
    scores = res @ wo.T + bo                                 # (B, S, 1)
    scores = jnp.transpose(scores, (0, 2, 1))                # (B, 1, S)
    return jax.nn.softmax(scores, axis=2)


if __name__ == "__main__":
    B, H, S, L = 2, 32, 16, 3   # batch, hidden_size, flattened spatial, decoder_layers

    key = jax.random.PRNGKey(0)
    k = jax.random.split(key, 8)
    bound = 1.0 / jnp.sqrt(H)
    wh = jax.random.uniform(k[0], (H, H), jnp.float32, -bound, bound)
    bh = jax.random.uniform(k[1], (H,),   jnp.float32, -bound, bound)
    we = jax.random.uniform(k[2], (H, H), jnp.float32, -bound, bound)
    be = jax.random.uniform(k[3], (H,),   jnp.float32, -bound, bound)
    wo = jax.random.uniform(k[4], (1, H), jnp.float32, -bound, bound)
    bo = jax.random.uniform(k[5], (1,),   jnp.float32, -bound, bound)
    params = (wh, bh, we, be, wo, bo)

    hidden = jax.random.normal(k[6], (L, B, H), jnp.float32)
    encoder_output = jax.random.normal(k[7], (B, H, S), jnp.float32)

    out = bahdanau_attention(hidden, encoder_output, params)
    out = jax.block_until_ready(out)

    ref = reference(hidden, encoder_output, params)
    assert out.shape == (B, 1, S), out.shape
    assert jnp.allclose(out, ref, atol=1e-5, rtol=1e-5), jnp.max(jnp.abs(out - ref))

    print("KERNEL_OK")
</pallas_src>

<mosaic_0001>
module attributes {stable_mosaic.version = 11 : i64} {
  func.func @bahdanau_kernel(%arg0: i32, %arg1: memref<2x32xf32, #tpu.memory_space<vmem>>, %arg2: memref<32x32xf32, #tpu.memory_space<vmem>>, %arg3: memref<32x32xf32, #tpu.memory_space<vmem>>, %arg4: memref<32x32xf32, #tpu.memory_space<vmem>>, %arg5: memref<1x32xf32, #tpu.memory_space<vmem>>, %arg6: memref<1x32xf32, #tpu.memory_space<vmem>>, %arg7: memref<1x1xf32, #tpu.memory_space<vmem>>, %arg8: memref<2x16xf32, #tpu.memory_space<vmem>>) attributes {dimension_semantics = [#tpu.dimension_semantics<arbitrary>], iteration_bounds = array<i64: 1>, scalar_prefetch = 0 : i64, scratch_operands = 0 : i64, tpu.core_type = #tpu.core_type<tc>, window_params = [{pipeline_mode = #tpu.pipeline_mode<synchronous>, transform_indices = @transform_0, window_bounds = array<i64: 2, 32>}, {pipeline_mode = #tpu.pipeline_mode<synchronous>, transform_indices = @transform_1, window_bounds = array<i64: 32, 32>}, {pipeline_mode = #tpu.pipeline_mode<synchronous>, transform_indices = @transform_2, window_bounds = array<i64: 32, 32>}, {pipeline_mode = #tpu.pipeline_mode<synchronous>, transform_indices = @transform_3, window_bounds = array<i64: 32, 32>}, {pipeline_mode = #tpu.pipeline_mode<synchronous>, transform_indices = @transform_4, window_bounds = array<i64: 1, 32>}, {pipeline_mode = #tpu.pipeline_mode<synchronous>, transform_indices = @transform_5, window_bounds = array<i64: 1, 32>}, {pipeline_mode = #tpu.pipeline_mode<synchronous>, transform_indices = @transform_6, window_bounds = array<i64: 1, 1>}, {pipeline_mode = #tpu.pipeline_mode<synchronous>, transform_indices = @transform_7, window_bounds = array<i64: 2, 16>}]} {
    %c0 = arith.constant 0 : index
    %c0_0 = arith.constant 0 : index
    %0 = vector.load %arg1[%c0, %c0_0] : memref<2x32xf32, #tpu.memory_space<vmem>>, vector<2x32xf32>
    %c0_1 = arith.constant 0 : index
    %c0_2 = arith.constant 0 : index
    %1 = vector.load %arg3[%c0_1, %c0_2] : memref<32x32xf32, #tpu.memory_space<vmem>>, vector<32x32xf32>
    %cst = arith.constant dense<0.000000e+00> : vector<2x32xf32>
    %2 = tpu.matmul %0, %1, %cst {dimension_numbers = #tpu.dot_dimension_numbers<[1], [0], [0], [1], [0, 0, 1, 1], [], []>} : vector<2x32xf32>, vector<32x32xf32>, vector<2x32xf32> -> vector<2x32xf32>
    %c0_3 = arith.constant 0 : index
    %c0_4 = arith.constant 0 : index
    %3 = vector.load %arg2[%c0_3, %c0_4] : memref<32x32xf32, #tpu.memory_space<vmem>>, vector<32x32xf32>
    %c0_5 = arith.constant 0 : index
    %c0_6 = arith.constant 0 : index
    %4 = vector.load %arg4[%c0_5, %c0_6] : memref<32x32xf32, #tpu.memory_space<vmem>>, vector<32x32xf32>
    %cst_7 = arith.constant dense<0.000000e+00> : vector<32x32xf32>
    %5 = tpu.matmul %3, %4, %cst_7 {dimension_numbers = #tpu.dot_dimension_numbers<[1], [0], [0], [1], [0, 0, 1, 1], [], []>} : vector<32x32xf32>, vector<32x32xf32>, vector<32x32xf32> -> vector<32x32xf32>
    %6 = vector.shape_cast %5 : vector<32x32xf32> to vector<2x16x32xf32>
    %7 = vector.shape_cast %2 : vector<2x32xf32> to vector<2x1x32xf32>
    %8 = vector.broadcast %7 : vector<2x1x32xf32> to vector<2x16x32xf32>
    %9 = arith.addf %6, %8 : vector<2x16x32xf32>
    %c0_8 = arith.constant 0 : index
    %c0_9 = arith.constant 0 : index
    %10 = vector.load %arg5[%c0_8, %c0_9] : memref<1x32xf32, #tpu.memory_space<vmem>>, vector<1x32xf32>
    %11 = vector.shape_cast %10 : vector<1x32xf32> to vector<1x1x32xf32>
    %12 = vector.broadcast %11 : vector<1x1x32xf32> to vector<2x16x32xf32>
    %13 = arith.addf %9, %12 : vector<2x16x32xf32>
    %14 = math.tanh %13 : vector<2x16x32xf32>
    %c0_10 = arith.constant 0 : index
    %c0_11 = arith.constant 0 : index
    %15 = vector.load %arg6[%c0_10, %c0_11] : memref<1x32xf32, #tpu.memory_space<vmem>>, vector<1x32xf32>
    %16 = vector.shape_cast %15 : vector<1x32xf32> to vector<1x1x32xf32>
    %17 = vector.broadcast %16 : vector<1x1x32xf32> to vector<2x16x32xf32>
    %18 = arith.mulf %14, %17 : vector<2x16x32xf32>
    %cst_12 = arith.constant dense<0.000000e+00> : vector<2x16xf32>
    %19 = vector.multi_reduction <add>, %18, %cst_12 [2] : vector<2x16x32xf32> to vector<2x16xf32>
    %c0_13 = arith.constant 0 : index
    %c0_14 = arith.constant 0 : index
    %20 = vector.load %arg7[%c0_13, %c0_14] : memref<1x1xf32, #tpu.memory_space<vmem>>, vector<1x1xf32>
    %21 = vector.broadcast %20 : vector<1x1xf32> to vector<2x16xf32>
    %22 = arith.addf %19, %21 : vector<2x16xf32>
    %cst_15 = arith.constant dense<0xFF800000> : vector<2xf32>
    %23 = vector.multi_reduction <maximumf>, %22, %cst_15 [1] : vector<2x16xf32> to vector<2xf32>
    %24 = vector.shape_cast %23 : vector<2xf32> to vector<2x1xf32>
    %25 = vector.broadcast %24 : vector<2x1xf32> to vector<2x16xf32>
    %26 = arith.subf %22, %25 : vector<2x16xf32>
    %27 = math.exp %26 : vector<2x16xf32>
    %cst_16 = arith.constant dense<0.000000e+00> : vector<2xf32>
    %28 = vector.multi_reduction <add>, %27, %cst_16 [1] : vector<2x16xf32> to vector<2xf32>
    %29 = vector.shape_cast %28 : vector<2xf32> to vector<2x1xf32>
    %30 = vector.broadcast %29 : vector<2x1xf32> to vector<2x16xf32>
    %31 = arith.divf %27, %30 : vector<2x16xf32>
    %c0_17 = arith.constant 0 : index
    %c0_18 = arith.constant 0 : index
    %32 = vector.load %arg8[%c0_17, %c0_18] : memref<2x16xf32, #tpu.memory_space<vmem>>, vector<2x16xf32>
    tpu.vector_store %arg8[%c0_17, %c0_18], %31 {strides = array<i32>} : memref<2x16xf32, #tpu.memory_space<vmem>>, vector<2x16xf32>,
    return
  }
  func.func @transform_0(%arg0: i32) -> (i32, i32) {
    %c0_i32 = arith.constant 0 : i32
    %c0_i32_0 = arith.constant 0 : i32
    %c0_i32_1 = arith.constant 0 : i32
    return %c0_i32, %c0_i32_0 : i32, i32
  }
  func.func @transform_1(%arg0: i32) -> (i32, i32) {
    %c0_i32 = arith.constant 0 : i32
    %c0_i32_0 = arith.constant 0 : i32
    %c0_i32_1 = arith.constant 0 : i32
    return %c0_i32, %c0_i32_0 : i32, i32
  }
  func.func @transform_2(%arg0: i32) -> (i32, i32) {
    %c0_i32 = arith.constant 0 : i32
    %c0_i32_0 = arith.constant 0 : i32
    %c0_i32_1 = arith.constant 0 : i32
    return %c0_i32, %c0_i32_0 : i32, i32
  }
  func.func @transform_3(%arg0: i32) -> (i32, i32) {
    %c0_i32 = arith.constant 0 : i32
    %c0_i32_0 = arith.constant 0 : i32
    %c0_i32_1 = arith.constant 0 : i32
    return %c0_i32, %c0_i32_0 : i32, i32
  }
  func.func @transform_4(%arg0: i32) -> (i32, i32) {
    %c0_i32 = arith.constant 0 : i32
    %c0_i32_0 = arith.constant 0 : i32
    %c0_i32_1 = arith.constant 0 : i32
    return %c0_i32, %c0_i32_0 : i32, i32
  }
  func.func @transform_5(%arg0: i32) -> (i32, i32) {
    %c0_i32 = arith.constant 0 : i32
    %c0_i32_0 = arith.constant 0 : i32
    %c0_i32_1 = arith.constant 0 : i32
    return %c0_i32, %c0_i32_0 : i32, i32
  }
  func.func @transform_6(%arg0: i32) -> (i32, i32) {
    %c0_i32 = arith.constant 0 : i32
    %c0_i32_0 = arith.constant 0 : i32
    %c0_i32_1 = arith.constant 0 : i32
    return %c0_i32, %c0_i32_0 : i32, i32
  }
  func.func @transform_7(%arg0: i32) -> (i32, i32) {
    %c0_i32 = arith.constant 0 : i32
    %c0_i32_0 = arith.constant 0 : i32
    %c0_i32_1 = arith.constant 0 : i32
    return %c0_i32, %c0_i32_0 : i32, i32
  }
}

</mosaic_0001>

<llo_original>
// kernel: bahdanau_attention.1
$region0: #{bahdanau_attention.1}
  #allocation0 [shape = 'u32[]', space=smem, size = 0x4, offset = 0x4, fixed_abs, tag = 'smem constant byte address 0x4 - core index']
  #allocation1 [shape = 'u32[144,128]{1,0:T(1,128)}', space=vmem, size = 0x12000, scoped, tag = 'internal scratch']
  #allocation2 [shape = 'f32[1,1]{1,0:T(1,128)S(1)}', space=vmem, size = 0x200, scoped, tag = 'scoped memory for bahdanau_attention.1']
  %s0 = inlined_call_operand.vmem [shape: f32[2,32], index: 0, kind: input, shape index: {}]
  %s1 = inlined_call_operand.vmem [shape: f32[32,32], index: 1, kind: input, shape index: {}]
  %s2 = inlined_call_operand.vmem [shape: f32[32,32], index: 2, kind: input, shape index: {}]
  %s3 = inlined_call_operand.vmem [shape: f32[32,32], index: 3, kind: input, shape index: {}]
  %s4 = inlined_call_operand.vmem [shape: f32[1,32], index: 4, kind: input, shape index: {}]
  %s5 = inlined_call_operand.vmem [shape: f32[1,32], index: 5, kind: input, shape index: {}]
  %s6 = inlined_call_operand.<no memory space> [shape: f32[1,1], index: 6, kind: input, shape index: {}]
  %s7 = inlined_call_operand.hbm [shape: f32[2,16], index: 7, kind: output, shape index: {}]
  %s8 = sld [smem:[#allocation0]]
  $region38: #{bahdanau_attention.1} parent=0
    _
  %s10 = ssub.s32 1, %s8
  %s11 = scalar_select 0, %s10, %s8
  %v12 = vstv %s6
  %13 = vst [vmem:[#allocation2] sm:$0x1] %v12
  $region1: #{bahdanau_attention.1} parent=0
    #allocation3 [shape = 'u8[1024]{0}', space=vmem, size = 0x400, scoped, tag = 'output window, operand 0, single buffered']
    #allocation4 [shape = 's32[1]{0}', space=sflag, size = 0x4, scoped, tag = 'scoped memory for bahdanau_attention.1']
    %14 = vsyncpa [#allocation4], 0
    // Predicated region
    $region2: #{bahdanau_attention.1} parent=1 // pred_check
      _
    $region3: #{bahdanau_attention.1} parent=1 // pred_check_branch
      %16 = sbr.rel (0) target = $region5
    $region4: #{bahdanau_attention.1} parent=1 // pred_region
      _
    $region5: #{bahdanau_attention.1} parent=1 // pred_fallthru
      _
    // Predicated region
    $region6: #{bahdanau_attention.1} parent=1 // pred_check
      _
    $region7: #{bahdanau_attention.1} parent=1 // pred_check_branch
      %18 = sbr.rel (0) target = $region9
    $region8: #{bahdanau_attention.1} parent=1 // pred_region
      _
    $region9: #{bahdanau_attention.1} parent=1 // pred_fallthru
      _
    // Predicated region
    $region10: #{bahdanau_attention.1} parent=1 // pred_check
      _
    $region11: #{bahdanau_attention.1} parent=1 // pred_check_branch
      %20 = sbr.rel (0) target = $region13
    $region12: #{bahdanau_attention.1} parent=1 // pred_region
      _
    $region13: #{bahdanau_attention.1} parent=1 // pred_fallthru
      _
    // Predicated region
    $region14: #{bahdanau_attention.1} parent=1 // pred_check
      _
    $region15: #{bahdanau_attention.1} parent=1 // pred_check_branch
      %22 = sbr.rel (0) target = $region17
    $region16: #{bahdanau_attention.1} parent=1 // pred_region
      _
    $region17: #{bahdanau_attention.1} parent=1 // pred_fallthru
      _
    // Predicated region
    $region18: #{bahdanau_attention.1} parent=1 // pred_check
      _
    $region19: #{bahdanau_attention.1} parent=1 // pred_check_branch
      %24 = sbr.rel (0) target = $region21
    $region20: #{bahdanau_attention.1} parent=1 // pred_region
      _
    $region21: #{bahdanau_attention.1} parent=1 // pred_fallthru
      _
    // Predicated region
    $region22: #{bahdanau_attention.1} parent=1 // pred_check
      _
    $region23: #{bahdanau_attention.1} parent=1 // pred_check_branch
      %26 = sbr.rel (0) target = $region25
    $region24: #{bahdanau_attention.1} parent=1 // pred_region
      _
    $region25: #{bahdanau_attention.1} parent=1 // pred_fallthru
      _
    // Predicated region
    $region26: #{bahdanau_attention.1} parent=1 // pred_check
      _
    $region27: #{bahdanau_attention.1} parent=1 // pred_check_branch
      %28 = sbr.rel (0) target = $region29
    $region28: #{bahdanau_attention.1} parent=1 // pred_region
      _
    $region29: #{bahdanau_attention.1} parent=1 // pred_fallthru
      _
    %v29 = vld [vmem:[%s0] sm:$0x3]
    %v30 = vld [vmem:[%s2] sm:$0xff]
    %v31 = vld [vmem:[%s2 + $0x8] sm:$0xff]
    %v32 = vld [vmem:[%s2 + $0x10] sm:$0xff]
    %v33 = vld [vmem:[%s2 + $0x18] sm:$0xff]
    %vm34 = vcmask 261120
    %v36 = vsel %vm34, %v29, 0
    %38 = vmatprep.subr.mxu0 0.0
    %39 = vmatpush1.msra.mxu0 0.0
    %40 = vmatprep.subr.mxu0 0.0
    %41 = vmatpush1.msra.mxu0 0.0
    %42 = vmatprep.subr.mxu0 0.0
    %43 = vmatpush1.msra.mxu0 0.0
    %44 = vmatprep.subr.mxu0 0.0
    %45 = vmatpush1.msra.mxu0 0.0
    %46 = vmatprep.subr.mxu0 0.0
    %47 = vmatpush1.msra.mxu0 0.0
    %48 = vmatprep.subr.mxu0 0.0
    %49 = vmatpush1.msra.mxu0 0.0
    %50 = vmatprep.subr.mxu0 0.0
    %51 = vmatpush1.msra.mxu0 0.0
    %52 = vmatprep.subr.mxu0 0.0
    %53 = vmatpush1.msra.mxu0 0.0
    %54 = vmatprep.subr.mxu0 0.0
    %55 = vmatpush1.msra.mxu0 0.0
    %56 = vmatprep.subr.mxu0 0.0
    %57 = vmatpush1.msra.mxu0 0.0
    %58 = vmatprep.subr.mxu0 0.0
    %59 = vmatpush1.msra.mxu0 0.0
    %60 = vmatprep.subr.mxu0 0.0
    %61 = vmatpush1.msra.mxu0 0.0
    %62 = vmatprep.subr.mxu0 0.0
    %63 = vmatpush1.msra.mxu0 %v33
    %64 = vmatprep.subr.mxu0 0.0
    %65 = vmatpush1.msra.mxu0 %v32
    %66 = vmatprep.subr.mxu0 0.0
    %67 = vmatpush1.msra.mxu0 %v31
    %68 = vmatprep.subr.mxu0 0.0
    %69 = vmatpush1.msra.mxu0 %v30
    %70 = vmatprep.subr.mxu0 0.0
    %71 = vmatpush2.msra.mxu0 0.0
    %72 = vmatprep.subr.mxu0 0.0
    %73 = vmatpush2.msra.mxu0 0.0
    %74 = vmatprep.subr.mxu0 0.0
    %75 = vmatpush2.msra.mxu0 0.0
    %76 = vmatprep.subr.mxu0 0.0
    %77 = vmatpush2.msra.mxu0 0.0
    %78 = vmatprep.subr.mxu0 0.0
    %79 = vmatpush2.msra.mxu0 0.0
    %80 = vmatprep.subr.mxu0 0.0
    %81 = vmatpush2.msra.mxu0 0.0
    %82 = vmatprep.subr.mxu0 0.0
    %83 = vmatpush2.msra.mxu0 0.0
    %84 = vmatprep.subr.mxu0 0.0
    %85 = vmatpush2.msra.mxu0 0.0
    %86 = vmatprep.subr.mxu0 0.0
    %87 = vmatpush2.msra.mxu0 0.0
    %88 = vmatprep.subr.mxu0 0.0
    %89 = vmatpush2.msra.mxu0 0.0
    %90 = vmatprep.subr.mxu0 0.0
    %91 = vmatpush2.msra.mxu0 0.0
    %92 = vmatprep.subr.mxu0 0.0
    %93 = vmatpush2.msra.mxu0 0.0
    %94 = vmatprep.subr.mxu0 0.0
    %95 = vmatpush2.msra.mxu0 0.0
    %96 = vmatprep.subr.mxu0 0.0
    %97 = vmatpush2.msra.mxu0 0.0
    %98 = vmatprep.subr.mxu0 0.0
    %99 = vmatpush2.msra.mxu0 0.0
    %100 = vmatprep.subr.mxu0 0.0
    %101 = vmatpush2.msra.mxu0 0.0
    %102 = vmatprep.mubr.f32.mxu0 0.0
    %103 = vmatmul.mubr.f32.gmra.mxu0 %v36
    %v104 = vpop.f32.mrf.mxu0
    %v105 = vadd.f32 0.0, %v104
    %v106 = vpop.f32.mrf.mxu0
    %107 = vdwg.mxu0
    %v108 = vld [vmem:[%s1] sm:$0xff]
    %v109 = vld [vmem:[%s1 + $0x8] sm:$0xff]
    %v110 = vld [vmem:[%s1 + $0x10] sm:$0xff]
    %v111 = vld [vmem:[%s1 + $0x18] sm:$0xff]
    %v112 = vld [vmem:[%s3] sm:$0xff]
    %v113 = vld [vmem:[%s3 + $0x8] sm:$0xff]
    %v114 = vld [vmem:[%s3 + $0x10] sm:$0xff]
    %v115 = vld [vmem:[%s3 + $0x18] sm:$0xff]
    %v117 = vsel %vm34, %v108, 0
    %v120 = vsel %vm34, %v109, 0
    %v123 = vsel %vm34, %v110, 0
    %v126 = vsel %vm34, %v111, 0
    %128 = vmatprep.subr.mxu0 0.0
    %129 = vmatpush1.msra.mxu0 0.0
    %130 = vmatprep.subr.mxu0 0.0
    %131 = vmatpush1.msra.mxu0 0.0
    %132 = vmatprep.subr.mxu0 0.0
    %133 = vmatpush1.msra.mxu0 0.0
    %134 = vmatprep.subr.mxu0 0.0
    %135 = vmatpush1.msra.mxu0 0.0
    %136 = vmatprep.subr.mxu0 0.0
    %137 = vmatpush1.msra.mxu0 0.0
    %138 = vmatprep.subr.mxu0 0.0
    %139 = vmatpush1.msra.mxu0 0.0
    %140 = vmatprep.subr.mxu0 0.0
    %141 = vmatpush1.msra.mxu0 0.0
    %142 = vmatprep.subr.mxu0 0.0
    %143 = vmatpush1.msra.mxu0 0.0
    %144 = vmatprep.subr.mxu0 0.0
    %145 = vmatpush1.msra.mxu0 0.0
    %146 = vmatprep.subr.mxu0 0.0
    %147 = vmatpush1.msra.mxu0 0.0
    %148 = vmatprep.subr.mxu0 0.0
    %149 = vmatpush1.msra.mxu0 0.0
    %150 = vmatprep.subr.mxu0 0.0
    %151 = vmatpush1.msra.mxu0 0.0
    %152 = vmatprep.subr.mxu0 0.0
    %153 = vmatpush1.msra.mxu0 %v115
    %154 = vmatprep.subr.mxu0 0.0
    %155 = vmatpush1.msra.mxu0 %v114
    %156 = vmatprep.subr.mxu0 0.0
    %157 = vmatpush1.msra.mxu0 %v113
    %158 = vmatprep.subr.mxu0 0.0
    %159 = vmatpush1.msra.mxu0 %v112
    %160 = vmatprep.subr.mxu0 0.0
    %161 = vmatpush2.msra.mxu0 0.0
    %162 = vmatprep.subr.mxu0 0.0
    %163 = vmatpush2.msra.mxu0 0.0
    %164 = vmatprep.subr.mxu0 0.0
    %165 = vmatpush2.msra.mxu0 0.0
    %166 = vmatprep.subr.mxu0 0.0
    %167 = vmatpush2.msra.mxu0 0.0
    %168 = vmatprep.subr.mxu0 0.0
    %169 = vmatpush2.msra.mxu0 0.0
    %170 = vmatprep.subr.mxu0 0.0
    %171 = vmatpush2.msra.mxu0 0.0
    %172 = vmatprep.subr.mxu0 0.0
    %173 = vmatpush2.msra.mxu0 0.0
    %174 = vmatprep.subr.mxu0 0.0
    %175 = vmatpush2.msra.mxu0 0.0
    %176 = vmatprep.subr.mxu0 0.0
    %177 = vmatpush2.msra.mxu0 0.0
    %178 = vmatprep.subr.mxu0 0.0
    %179 = vmatpush2.msra.mxu0 0.0
    %180 = vmatprep.subr.mxu0 0.0
    %181 = vmatpush2.msra.mxu0 0.0
    %182 = vmatprep.subr.mxu0 0.0
    %183 = vmatpush2.msra.mxu0 0.0
    %184 = vmatprep.subr.mxu0 0.0
    %185 = vmatpush2.msra.mxu0 0.0
    %186 = vmatprep.subr.mxu0 0.0
    %187 = vmatpush2.msra.mxu0 0.0
    %188 = vmatprep.subr.mxu0 0.0
    %189 = vmatpush2.msra.mxu0 0.0
    %190 = vmatprep.subr.mxu0 0.0
    %191 = vmatpush2.msra.mxu0 0.0
    %192 = vmatprep.mubr.f32.mxu0 0.0
    %193 = vmatmul.mubr.f32.gmra.mxu0 %v117
    %v194 = vpop.f32.mrf.mxu0
    %v195 = vadd.f32 0.0, %v194
    %v196 = vpop.f32.mrf.mxu0
    %197 = vmatprep.mubr.f32.mxu0 0.0
    %198 = vmatmul.mubr.f32.gmra.mxu0 %v120
    %v199 = vpop.f32.mrf.mxu0
    %v200 = vadd.f32 0.0, %v199
    %v201 = vpop.f32.mrf.mxu0
    %202 = vmatprep.mubr.f32.mxu0 0.0
    %203 = vmatmul.mubr.f32.gmra.mxu0 %v123
    %v204 = vpop.f32.mrf.mxu0
    %v205 = vadd.f32 0.0, %v204
    %v206 = vpop.f32.mrf.mxu0
    %207 = vmatprep.mubr.f32.mxu0 0.0
    %208 = vmatmul.mubr.f32.gmra.mxu0 %v126
    %v209 = vpop.f32.mrf.mxu0
    %v210 = vadd.f32 0.0, %v209
    %v211 = vpop.f32.mrf.mxu0
    %212 = vdwg.mxu0
    %v215 = vunpack.c.l.s4 1966171168
    %v216 = vunpack.c.0.s8 %v215
    %v217 = vlaneseq
    %v218 = vshrl.u32 %v217, 7
    %v219 = vsub.s32 %v216, %v218
    %v220 = vrot.slane %v105, %v219
    %v221 = vcombine.high %v220, %v220
    %v223 = vunpack.c.l.s4 1966171168
    %v224 = vunpack.c.0.s8 %v223
    %v225 = vlaneseq
    %v226 = vshrl.u32 %v225, 7
    %v227 = vsub.s32 %v224, %v226
    %v228 = vrot.slane %v220, %v227
    %v230 = vunpack.c.l.s4 1966171168
    %v231 = vunpack.c.0.s8 %v230
    %v232 = vlaneseq
    %v233 = vshrl.u32 %v232, 7
    %v234 = vsub.s32 %v231, %v233
    %v235 = vrot.slane %v221, %v234
    %v236 = vlaneseq
    %v237 = vshrl.u32 %v236, 7
    %v238 = vsub.s32 0, %v237
    %v239 = vrot.slane %v228, %v238
    %v240 = vlaneseq
    %v241 = vshrl.u32 %v240, 7
    %v242 = vsub.s32 0, %v241
    %v243 = vrot.slane %v235, %v242
    %v246 = vadd.f32 %v195, %v239
    %v247 = vadd.f32 %v200, %v239
    %v248 = vadd.f32 %v205, %v243
    %v249 = vadd.f32 %v210, %v243
    %v250 = vld [vmem:[%s4] sm:$0x1]
    %v252 = vlaneseq
    %v253 = vshrl.u32 %v252, 7
    %v254 = vsub.s32 0, %v253
    %v255 = vrot.slane %v250, %v254
    %v257 = vadd.f32 %v246, %v255
    %v258 = vadd.f32 %v247, %v255
    %v259 = vadd.f32 %v248, %v255
    %v260 = vadd.f32 %v249, %v255
    %v261 = vtanh.pop %v257
    %v262 = vtanh.pop %v258
    %v263 = vtanh.pop %v259
    %v264 = vtanh.pop %v260
    %v265 = vld [vmem:[%s5] sm:$0x1]
    %v267 = vlaneseq
    %v268 = vshrl.u32 %v267, 7
    %v269 = vsub.s32 0, %v268
    %v270 = vrot.slane %v265, %v269
    %v272 = vmul.f32 %v261, %v270
    %v273 = vmul.f32 %v262, %v270
    %v274 = vmul.f32 %v263, %v270
    %v275 = vmul.f32 %v264, %v270
    %v276 = vsel %vm34, %v272, 0.0
    %277 = vadd.xlane.f32.xlu0 %v276
    %v278 = vpop.xlane.xlu0 %277
    %v279 = vsel %vm34, %v273, 0.0
    %280 = vadd.xlane.f32.xlu0 %v279
    %v281 = vpop.xlane.xlu0 %280
    %v282 = vsel %vm34, %v274, 0.0
    %283 = vadd.xlane.f32.xlu0 %v282
    %v284 = vpop.xlane.xlu0 %283
    %v285 = vsel %vm34, %v275, 0.0
    %286 = vadd.xlane.f32.xlu0 %v285
    %v287 = vpop.xlane.xlu0 %286
    %v288 = vld [vmem:[#allocation2] sm:$0x1]
    %v290 = vlaneseq
    %v291 = vshrl.u32 %v290, 7
    %v292 = vsub.s32 0, %v291
    %v293 = vrot.slane %v288, %v292
    %294 = vset.pattern.permute.xlu0 0
    %295 = vperm.xlu0 %294, %v293
    %v296 = vpop.permute.xlu0 %295
    %v298 = vadd.f32 %v278, %v296
    %v299 = vadd.f32 %v281, %v296
    %v300 = vadd.f32 %v284, %v296
    %v301 = vadd.f32 %v287, %v296
    %v306 = vlaneseq
    %v307 = vand.u32 %v306, 127
    %v308 = vlaneseq
    %v309 = vshrl.u32 %v308, 7
    %v310 = vsub.s32 %v307, %v309
    %v311 = vrot.slane %v298, %v310
    %v312 = vadd.s32 %v307, 4294967288
    %v313 = vlaneseq
    %v314 = vshrl.u32 %v313, 7
    %v315 = vsub.s32 %v312, %v314
    %v316 = vrot.slane %v299, %v315
    %vm317 = vcmask 130112
    %v318 = vsel %vm317, %v316, %v311
    %v319 = vlaneseq
    %v320 = vshrl.u32 %v319, 7
    %v321 = vsub.s32 %v307, %v320
    %v322 = vrot.slane %v300, %v321
    %v323 = vlaneseq
    %v324 = vshrl.u32 %v323, 7
    %v325 = vsub.s32 %v312, %v324
    %v326 = vrot.slane %v301, %v325
    %v327 = vsel %vm317, %v326, %v322
    %vm328 = vcmask 1041409
    %v329 = vsel %vm328, %v327, %v318
    %vm331 = vcmask 123904
    %v332 = vsel %vm331, %v329, -inf
    %333 = vmax.xlane.f32.xlu0 %v332
    %v334 = vpop.xlane.xlu0 %333
    %v336 = vlaneseq
    %v337 = vshrl.u32 %v336, 7
    %v338 = vsub.s32 0, %v337
    %v339 = vrot.slane %v334, %v338
    %v340 = vlaneseq
    %v341 = vshrl.u32 %v340, 7
    %v342 = vsub.s32 1, %v341
    %v343 = vrot.slane %v334, %v342
    %v346 = vsub.f32 %v298, %v339
    %v347 = vsub.f32 %v299, %v339
    %v348 = vsub.f32 %v300, %v343
    %v349 = vsub.f32 %v301, %v343
    %v350 = vmul.f32 %v346, 1.442695
    %v351 = vpow.pop %v350
    %v352 = vmul.f32 %v347, 1.442695
    %v353 = vpow.pop %v352
    %v354 = vmul.f32 %v348, 1.442695
    %v355 = vpow.pop %v354
    %v356 = vmul.f32 %v349, 1.442695
    %v357 = vpow.pop %v356
    %362 = vset.pattern.permute.xlu0 0
    %363 = vperm.xlu0 %362, %v351
    %v364 = vpop.permute.xlu0 %363
    %365 = vset.pattern.permute.xlu0 0
    %366 = vperm.xlu0 %365, %v353
    %v367 = vpop.permute.xlu0 %366
    %368 = vset.pattern.permute.xlu0 0
    %369 = vperm.xlu0 %368, %v355
    %v370 = vpop.permute.xlu0 %369
    %371 = vset.pattern.permute.xlu0 0
    %372 = vperm.xlu0 %371, %v357
    %v373 = vpop.permute.xlu0 %372
    %v374 = vlaneseq
    %v375 = vshrl.u32 %v374, 7
    %v376 = vsub.s32 %v307, %v375
    %v377 = vrot.slane %v364, %v376
    %v378 = vlaneseq
    %v379 = vshrl.u32 %v378, 7
    %v380 = vsub.s32 %v312, %v379
    %v381 = vrot.slane %v367, %v380
    %v382 = vsel %vm317, %v381, %v377
    %v383 = vlaneseq
    %v384 = vshrl.u32 %v383, 7
    %v385 = vsub.s32 %v307, %v384
    %v386 = vrot.slane %v370, %v385
    %v387 = vlaneseq
    %v388 = vshrl.u32 %v387, 7
    %v389 = vsub.s32 %v312, %v388
    %v390 = vrot.slane %v373, %v389
    %v391 = vsel %vm317, %v390, %v386
    %v392 = vsel %vm328, %v391, %v382
    %v394 = vsel %vm331, %v392, 0.0
    %395 = vadd.xlane.f32.xlu0 %v394
    %v396 = vpop.xlane.xlu0 %395
    %v398 = vlaneseq
    %v399 = vshrl.u32 %v398, 7
    %v400 = vsub.s32 0, %v399
    %v401 = vrot.slane %v396, %v400
    %v402 = vlaneseq
    %v403 = vshrl.u32 %v402, 7
    %v404 = vsub.s32 1, %v403
    %v405 = vrot.slane %v396, %v404
    %v408 = vrcp.pop %v401
    %v409 = vmul.f32 %v351, %v408
    %v410 = vmul.f32 %v353, %v408
    %v411 = vrcp.pop %v405
    %v412 = vmul.f32 %v355, %v411
    %v413 = vmul.f32 %v357, %v411
    %418 = vset.pattern.permute.xlu0 0
    %419 = vperm.xlu0 %418, %v409
    %v420 = vpop.permute.xlu0 %419
    %421 = vset.pattern.permute.xlu0 0
    %422 = vperm.xlu0 %421, %v410
    %v423 = vpop.permute.xlu0 %422
    %424 = vset.pattern.permute.xlu0 0
    %425 = vperm.xlu0 %424, %v412
    %v426 = vpop.permute.xlu0 %425
    %427 = vset.pattern.permute.xlu0 0
    %428 = vperm.xlu0 %427, %v413
    %v429 = vpop.permute.xlu0 %428
    %v430 = vlaneseq
    %v431 = vshrl.u32 %v430, 7
    %v432 = vsub.s32 %v307, %v431
    %v433 = vrot.slane %v420, %v432
    %v434 = vlaneseq
    %v435 = vshrl.u32 %v434, 7
    %v436 = vsub.s32 %v312, %v435
    %v437 = vrot.slane %v423, %v436
    %v438 = vsel %vm317, %v437, %v433
    %v439 = vlaneseq
    %v440 = vshrl.u32 %v439, 7
    %v441 = vsub.s32 %v307, %v440
    %v442 = vrot.slane %v426, %v441
    %v443 = vlaneseq
    %v444 = vshrl.u32 %v443, 7
    %v445 = vsub.s32 %v312, %v444
    %v446 = vrot.slane %v429, %v445
    %v447 = vsel %vm317, %v446, %v442
    %v448 = vsel %vm328, %v447, %v438
    %450 = vst.msk [vmem:[#allocation3] sm:$0x3] %vm331, %v448
    // Predicated region
    $region30: #{bahdanau_attention.1} parent=1 // pred_check
      _
    $region31: #{bahdanau_attention.1} parent=1 // pred_check_branch
      %452 = sbr.rel (0) target = $region33
    $region32: #{bahdanau_attention.1} parent=1 // pred_region
      %s454 = ssub.s32 32, 32
      %455 = vsyncadd [#allocation4], %s454
      %s457 = sshll.u32 [#allocation3], 4
      %s458 = int_to_ptr.vmem [resolvable:$true] %s457
      %460 = dma.vmem_to_hbm [thread:$0]  %s458, 32, %s7, [#allocation4]
    $region33: #{bahdanau_attention.1} parent=1 // pred_fallthru
      _
    // Predicated region
    $region34: #{bahdanau_attention.1} parent=1 // pred_check
      _
    $region35: #{bahdanau_attention.1} parent=1 // pred_check_branch
      %462 = sbr.rel (0) target = $region37
    $region36: #{bahdanau_attention.1} parent=1 // pred_region
      %463 = dma.done [#allocation4], 32
    $region37: #{bahdanau_attention.1} parent=1 // pred_fallthru
      _
    %464 = vsyncpa [#allocation4], 1

</llo_original>
